<compile_context>
chip_gen: v5e
topology: v5e:2x2
jax: 0.10.0
libtpu: 0.0.40
codegen_flags: <defaults>
</compile_context>

<pallas_src>
import functools

import jax
import jax.numpy as jnp
from jax.experimental import pallas as pl
from jax.experimental.pallas import tpu as pltpu

_LANE = 128              # lane tile (last dim)
_SUBLANE = 8             # f32 sublane tile (second-to-last dim)
_GRIDLESS_MAX_ROWS = 512 # above this row count, use the pipelined 1-D grid over rows
_ROW_TILE = 512          # M tile for the grid path (x tile 64 KiB + out tile 256 KiB,
                         # double-buffered << v7x's 32 MiB scoped VMEM default)


def _round_up(n, m):
    return ((n + m - 1) // m) * m


def _linear_bias_kernel(x_ref, wt_ref, b_ref, o_ref):
    # Single MXU matmul with f32 accumulation + VPU bias add, all resident in VMEM.
    acc = jnp.dot(x_ref[...], wt_ref[...], preferred_element_type=jnp.float32)
    o_ref[...] = (acc + b_ref[...]).astype(o_ref.dtype)


def prepare_params(weight, bias):
    """One-time parameter prep (do this at init, NOT per forward call).

    weight: (num_outputs, num_inputs) -> wt_pad: (num_inputs, N_pad) pre-transposed,
    bias:   (num_outputs,)            -> b_pad:  (1, N_pad)
    with N_pad = round_up(num_outputs, 128) so every kernel output store is an
    unmasked, lane-dense vst.

    TODO(synk): optionally cast wt_pad/b_pad (and x in the wrapper) to bf16 to halve
    DMA bytes and double MXU rate on v6e/v7x; keep f32 accumulation + f32 bias add.
    Kept f32 here to match the PyTorch reference bit-for-bit-ish.
    TODO(synk): if the producer of x can emit a 128-lane-padded feature dim, also
    zero-pad K here (never add a per-call jnp.pad for it).
    """
    num_outputs, num_inputs = weight.shape
    n_pad = _round_up(num_outputs, _LANE)
    wt_pad = jnp.zeros((num_inputs, n_pad), weight.dtype).at[:, :num_outputs].set(weight.T)
    b_pad = jnp.zeros((1, n_pad), bias.dtype).at[0, :num_outputs].set(bias)
    return wt_pad, b_pad, num_outputs


def _linear_padded(x2d, wt_pad, b_pad):
    """x2d: (M, num_inputs). Returns a lane-dense (M_pad, N_pad) slab.

    Must be called under jit (all public wrappers below are jitted)."""
    M, K = x2d.shape
    n_pad = wt_pad.shape[1]
    dtype = x2d.dtype

    if M <= _GRIDLESS_MAX_ROWS:
        # Tiny case: single invocation, whole arrays pinned in VMEM (no pointless
        # double-buffering / pipeline prologue for a one-tile problem).
        m_pad = _round_up(max(M, 1), _SUBLANE)
        if m_pad != M:
            x2d = jnp.pad(x2d, ((0, m_pad - M), (0, 0)))
        cost = pl.CostEstimate(
            flops=2 * m_pad * K * n_pad,
            transcendentals=0,
            bytes_accessed=4 * (m_pad * K + K * n_pad + n_pad + m_pad * n_pad))
        return pl.pallas_call(
            _linear_bias_kernel,
            out_shape=jax.ShapeDtypeStruct((m_pad, n_pad), dtype),
            in_specs=[
                pl.BlockSpec(memory_space=pltpu.MemorySpace.VMEM),
                pl.BlockSpec(memory_space=pltpu.MemorySpace.VMEM),
                pl.BlockSpec(memory_space=pltpu.MemorySpace.VMEM),
            ],
            out_specs=pl.BlockSpec(memory_space=pltpu.MemorySpace.VMEM),
            cost_estimate=cost,
        )(x2d, wt_pad, b_pad)

    # Large fused batch: pipelined 1-D grid over rows. Weights/bias have constant
    # index_maps (loaded once, VMEM-resident); x/out tiles double-buffer and
    # overlap DMA with the MXU. "parallel" lets v7x split rows across its 2 TCs.
    m_pad = _round_up(M, _ROW_TILE)
    if m_pad != M:
        x2d = jnp.pad(x2d, ((0, m_pad - M), (0, 0)))
    grid = (m_pad // _ROW_TILE,)
    cost = pl.CostEstimate(
        flops=2 * m_pad * K * n_pad,
        transcendentals=0,
        bytes_accessed=4 * (m_pad * K + K * n_pad + n_pad + m_pad * n_pad))
    return pl.pallas_call(
        _linear_bias_kernel,
        out_shape=jax.ShapeDtypeStruct((m_pad, n_pad), dtype),
        grid_spec=pltpu.PrefetchScalarGridSpec(
            num_scalar_prefetch=0,
            grid=grid,
            in_specs=[
                pl.BlockSpec((_ROW_TILE, K), lambda i: (i, 0)),
                pl.BlockSpec((K, n_pad), lambda i: (0, 0)),
                pl.BlockSpec((1, n_pad), lambda i: (0, 0)),
            ],
            out_specs=pl.BlockSpec((_ROW_TILE, n_pad), lambda i: (i, 0)),
        ),
        compiler_params=pltpu.CompilerParams(
            dimension_semantics=("parallel",)),
        cost_estimate=cost,
    )(x2d, wt_pad, b_pad)


# ---------------------------------------------------------------------------
# Jitted wrappers (pad + pallas_call + slice/reshape fused into one executable).
# ---------------------------------------------------------------------------

@functools.partial(jax.jit, static_argnames=("num_outputs",))
def _forward2d_jit(x2d, wt_pad, b_pad, num_outputs):
    out_pad = _linear_padded(x2d, wt_pad, b_pad)
    return out_pad[: x2d.shape[0], :num_outputs]


@jax.jit
def _forward2d_padded_jit(x2d, wt_pad, b_pad):
    return _linear_padded(x2d, wt_pad, b_pad)


@functools.partial(jax.jit, static_argnames=("num_outputs",))
def _forward_fused_jit(x_steps, wt_pad, b_pad, num_outputs):
    T, B, K = x_steps.shape
    out_pad = _linear_padded(x_steps.reshape(T * B, K), wt_pad, b_pad)
    return out_pad[: T * B, :num_outputs].reshape(T, B, num_outputs)


# ---------------------------------------------------------------------------
# Public API (matches MLPController.forward semantics: returns (out, prev_state)).
# ---------------------------------------------------------------------------

def mlp_controller_forward(x, wt_pad, b_pad, num_outputs, prev_state=(None, None)):
    """Single controller step. x: (B, num_inputs) -> (B, num_outputs), prev_state."""
    return _forward2d_jit(x, wt_pad, b_pad, num_outputs), prev_state


def mlp_controller_forward_padded(x, wt_pad, b_pad, prev_state=(None, None)):
    """Same, but returns the lane-dense (M_pad, N_pad) slab WITHOUT slicing, for
    consumers that can read padded data (avoids a masked-store copy per step)."""
    return _forward2d_padded_jit(x, wt_pad, b_pad), prev_state


def mlp_controller_forward_fused(x_steps, wt_pad, b_pad, num_outputs,
                                 prev_state=(None, None)):
    """T controller timesteps in ONE pallas_call (valid only because this controller
    has no recurrence). x_steps: (T, B, num_inputs) -> (T, B, num_outputs)."""
    return _forward_fused_jit(x_steps, wt_pad, b_pad, num_outputs), prev_state


def init_params(key, num_inputs, num_outputs, dtype=jnp.float32):
    """Mirrors MLPController.reset_parameters():
       weight: xavier_uniform with gain=calculate_gain('relu')=sqrt(2)
       bias:   default nn.Linear init, U(-1/sqrt(fan_in), 1/sqrt(fan_in))."""
    kw, kb = jax.random.split(key)
    gain = jnp.sqrt(2.0)
    fan_in, fan_out = num_inputs, num_outputs
    limit_w = gain * jnp.sqrt(6.0 / (fan_in + fan_out))
    weight = jax.random.uniform(
        kw, (num_outputs, num_inputs), dtype=dtype, minval=-limit_w, maxval=limit_w)
    limit_b = 1.0 / jnp.sqrt(fan_in)
    bias = jax.random.uniform(
        kb, (num_outputs,), dtype=dtype, minval=-limit_b, maxval=limit_b)
    return weight, bias


if __name__ == "__main__":
    # Small shapes consistent with the module: x is (batch, num_inputs).
    batch, num_inputs, num_outputs = 8, 32, 32

    key = jax.random.PRNGKey(0)
    kx, kxs, kxl, kp = jax.random.split(key, 4)
    x = jax.random.normal(kx, (batch, num_inputs), dtype=jnp.float32)

    weight, bias = init_params(kp, num_inputs, num_outputs)
    # One-time prep: pre-transpose + lane-pad parameters (no per-call weight.T / pad).
    wt_pad, b_pad, n_out = prepare_params(weight, bias)

    prev_state = (None, None)  # MLPController.create_new_state returns (None, None)

    # 1) Single-step forward (matches the module's forward exactly).
    out, state = mlp_controller_forward(x, wt_pad, b_pad, n_out, prev_state)
    out = jax.block_until_ready(out)
    ref = x @ weight.T + bias
    assert out.shape == (batch, num_outputs)
    assert jnp.allclose(out, ref, atol=1e-5, rtol=1e-5)
    assert state == prev_state

    # 2) Padded-slab variant (lane-dense output for downstream kernels).
    out_pad, state = mlp_controller_forward_padded(x, wt_pad, b_pad, prev_state)
    out_pad = jax.block_until_ready(out_pad)
    assert out_pad.shape[1] == _round_up(num_outputs, _LANE)
    assert jnp.allclose(out_pad[:batch, :num_outputs], ref, atol=1e-5, rtol=1e-5)
    assert state == prev_state

    # 3) Fused multi-timestep forward, small T -> gridless path (256 rows).
    T_small = 32
    x_small = jax.random.normal(kxs, (T_small, batch, num_inputs), dtype=jnp.float32)
    out_f, state = mlp_controller_forward_fused(x_small, wt_pad, b_pad, n_out, prev_state)
    out_f = jax.block_until_ready(out_f)
    ref_f = jnp.einsum("tbk,nk->tbn", x_small, weight) + bias
    assert out_f.shape == (T_small, batch, num_outputs)
    assert jnp.allclose(out_f, ref_f, atol=1e-5, rtol=1e-5)
    assert state == prev_state

    # 4) Fused multi-timestep forward, larger T -> pipelined row-grid path
    #    (1024 rows -> two 512-row tiles, weights resident, rows parallel on v7x).
    T_large = 128
    x_large = jax.random.normal(kxl, (T_large, batch, num_inputs), dtype=jnp.float32)
    out_g, state = mlp_controller_forward_fused(x_large, wt_pad, b_pad, n_out, prev_state)
    out_g = jax.block_until_ready(out_g)
    ref_g = jnp.einsum("tbk,nk->tbn", x_large, weight) + bias
    assert out_g.shape == (T_large, batch, num_outputs)
    assert jnp.allclose(out_g, ref_g, atol=1e-5, rtol=1e-5)
    assert state == prev_state

    print("KERNEL_OK")
</pallas_src>

<mosaic_0001>
module attributes {stable_mosaic.version = 11 : i64} {
  func.func @_linear_bias_kernel(%arg0: memref<8x32xf32, #tpu.memory_space<vmem>>, %arg1: memref<32x128xf32, #tpu.memory_space<vmem>>, %arg2: memref<1x128xf32, #tpu.memory_space<vmem>>, %arg3: memref<8x128xf32, #tpu.memory_space<vmem>>) attributes {dimension_semantics = [], scalar_prefetch = 0 : i64, scratch_operands = 0 : i64, tpu.core_type = #tpu.core_type<tc>} {
    %c0 = arith.constant 0 : index
    %c0_0 = arith.constant 0 : index
    %0 = vector.load %arg0[%c0, %c0_0] : memref<8x32xf32, #tpu.memory_space<vmem>>, vector<8x32xf32>
    %c0_1 = arith.constant 0 : index
    %c0_2 = arith.constant 0 : index
    %1 = vector.load %arg1[%c0_1, %c0_2] : memref<32x128xf32, #tpu.memory_space<vmem>>, vector<32x128xf32>
    %cst = arith.constant dense<0.000000e+00> : vector<8x128xf32>
    %2 = tpu.matmul %0, %1, %cst {dimension_numbers = #tpu.dot_dimension_numbers<[1], [0], [0], [1], [0, 0, 1, 1], [], []>} : vector<8x32xf32>, vector<32x128xf32>, vector<8x128xf32> -> vector<8x128xf32>
    %c0_3 = arith.constant 0 : index
    %c0_4 = arith.constant 0 : index
    %3 = vector.load %arg2[%c0_3, %c0_4] : memref<1x128xf32, #tpu.memory_space<vmem>>, vector<1x128xf32>
    %4 = vector.broadcast %3 : vector<1x128xf32> to vector<8x128xf32>
    %5 = arith.addf %2, %4 : vector<8x128xf32>
    %c0_5 = arith.constant 0 : index
    %c0_6 = arith.constant 0 : index
    %6 = vector.load %arg3[%c0_5, %c0_6] : memref<8x128xf32, #tpu.memory_space<vmem>>, vector<8x128xf32>
    tpu.vector_store %arg3[%c0_5, %c0_6], %5 {strides = array<i32>} : memref<8x128xf32, #tpu.memory_space<vmem>>, vector<8x128xf32>,
    return
  }
}

</mosaic_0001>

<llo_original>
// kernel: _forward2d_jit.1
$region0: #{_forward2d_jit.1}
  #allocation0 [shape = 'u32[]', space=smem, size = 0x4, offset = 0x4, fixed_abs, tag = 'smem constant byte address 0x4 - core index']
  #allocation1 [shape = 'u32[72,128]{1,0:T(1,128)}', space=vmem, size = 0x9000, scoped, tag = 'internal scratch']
  %s0 = inlined_call_operand.hbm [shape: f32[8,32], index: 0, kind: input, shape index: {}]
  %s1 = inlined_call_operand.hbm [shape: f32[32,128], index: 1, kind: input, shape index: {}]
  %s2 = inlined_call_operand.vmem [shape: f32[1,128], index: 2, kind: input, shape index: {}]
  %s3 = inlined_call_operand.hbm [shape: f32[8,128], index: 3, kind: output, shape index: {}]
  %s4 = sld [smem:[#allocation0]]
  $region30: #{_forward2d_jit.1} parent=0
    _
  %s6 = ssub.s32 1, %s4
  %s7 = scalar_select 0, %s6, %s4
  $region1: #{_forward2d_jit.1} parent=0
    #allocation2 [shape = 'u8[4096]{0}', space=vmem, size = 0x1000, scoped, tag = 'input window, operand 0, single buffered']
    #allocation3 [shape = 's32[1]{0}', space=sflag, size = 0x4, scoped, tag = 'scoped memory for _forward2d_jit.1']
    #allocation4 [shape = 's32[1]{0}', space=sflag, size = 0x4, scoped, tag = 'scoped memory for _forward2d_jit.1']
    #allocation5 [shape = 'u8[16384]{0}', space=vmem, size = 0x4000, scoped, tag = 'input window, operand 1, single buffered']
    #allocation6 [shape = 's32[1]{0}', space=sflag, size = 0x4, scoped, tag = 'scoped memory for _forward2d_jit.1']
    #allocation7 [shape = 'u8[4096]{0}', space=vmem, size = 0x1000, scoped, tag = 'output window, operand 0, single buffered']
    %8 = vsyncpa [#allocation3], 0
    %9 = vsyncpa [#allocation6], 0
    %10 = vsyncpa [#allocation4], 0
    // Predicated region
    $region2: #{_forward2d_jit.1} parent=1 // pred_check
      _
    $region3: #{_forward2d_jit.1} parent=1 // pred_check_branch
      %12 = sbr.rel (0) target = $region5
    $region4: #{_forward2d_jit.1} parent=1 // pred_region
      %14 = vsyncadd [#allocation3], 0
      %s16 = sshll.u32 %s0, 4
      %s17 = int_to_ptr.hbm [resolvable:$true] %s16
      %s18 = sshll.u32 [#allocation2], 4
      %s19 = int_to_ptr.vmem [resolvable:$true] %s18
      %21 = dma.hbm_to_vmem [thread:$0]  %s17, 128, %s19, [#allocation3]
    $region5: #{_forward2d_jit.1} parent=1 // pred_fallthru
      _
    // Predicated region
    $region6: #{_forward2d_jit.1} parent=1 // pred_check
      _
    $region7: #{_forward2d_jit.1} parent=1 // pred_check_branch
      %23 = sbr.rel (0) target = $region9
    $region8: #{_forward2d_jit.1} parent=1 // pred_region
      %25 = vsyncadd [#allocation6], 0
      %s26 = sshll.u32 %s1, 4
      %s27 = int_to_ptr.hbm [resolvable:$true] %s26
      %s28 = sshll.u32 [#allocation5], 4
      %s29 = int_to_ptr.vmem [resolvable:$true] %s28
      %34 = dma.hbm_to_vmem [thread:$0]  %s27, 512, %s29, [#allocation6], 128, 128, 8
    $region9: #{_forward2d_jit.1} parent=1 // pred_fallthru
      _
    // Predicated region
    $region10: #{_forward2d_jit.1} parent=1 // pred_check
      _
    $region11: #{_forward2d_jit.1} parent=1 // pred_check_branch
      %36 = sbr.rel (0) target = $region13
    $region12: #{_forward2d_jit.1} parent=1 // pred_region
      _
    $region13: #{_forward2d_jit.1} parent=1 // pred_fallthru
      _
    // Predicated region
    $region14: #{_forward2d_jit.1} parent=1 // pred_check
      _
    $region15: #{_forward2d_jit.1} parent=1 // pred_check_branch
      %38 = sbr.rel (0) target = $region17
    $region16: #{_forward2d_jit.1} parent=1 // pred_region
      %40 = dma.done [#allocation3], 128
    $region17: #{_forward2d_jit.1} parent=1 // pred_fallthru
      _
    // Predicated region
    $region18: #{_forward2d_jit.1} parent=1 // pred_check
      _
    $region19: #{_forward2d_jit.1} parent=1 // pred_check_branch
      %42 = sbr.rel (0) target = $region21
    $region20: #{_forward2d_jit.1} parent=1 // pred_region
      %44 = dma.done [#allocation6], 512
    $region21: #{_forward2d_jit.1} parent=1 // pred_fallthru
      _
    %v45 = vld [vmem:[#allocation2] sm:$0xff]
    %v46 = vld [vmem:[#allocation5] sm:$0xff]
    %v47 = vld [vmem:[#allocation5 + $0x8] sm:$0xff]
    %v48 = vld [vmem:[#allocation5 + $0x10] sm:$0xff]
    %v49 = vld [vmem:[#allocation5 + $0x18] sm:$0xff]
    %v50 = vld [vmem:[%s2] sm:$0x1]
    %v52 = vperm.slane %v50, 0
    %vm54 = vcmask 261120
    %v56 = vsel %vm54, %v45, 0
    %58 = vmatpush.msra.mxu0 0.0
    %59 = vmatpush.msra.mxu0 0.0
    %60 = vmatpush.msra.mxu0 0.0
    %61 = vmatpush.msra.mxu0 0.0
    %62 = vmatpush.msra.mxu0 0.0
    %63 = vmatpush.msra.mxu0 0.0
    %64 = vmatpush.msra.mxu0 0.0
    %65 = vmatpush.msra.mxu0 0.0
    %66 = vmatpush.msra.mxu0 0.0
    %67 = vmatpush.msra.mxu0 0.0
    %68 = vmatpush.msra.mxu0 0.0
    %69 = vmatpush.msra.mxu0 0.0
    %70 = vmatpush.msra.mxu0 %v49
    %71 = vmatpush.msra.mxu0 %v48
    %72 = vmatpush.msra.mxu0 %v47
    %73 = vmatpush.msra.mxu0 %v46
    %74 = vmatmul.f32.gmra.mxu0 %v56
    %v75 = vpop.f32.mrf.mxu0
    %v76 = vadd.f32 %v52, %v75
    %77 = vdwg.mxu0
    %78 = vst [vmem:[#allocation7] sm:$0xff] %v76
    // Predicated region
    $region22: #{_forward2d_jit.1} parent=1 // pred_check
      _
    $region23: #{_forward2d_jit.1} parent=1 // pred_check_branch
      %80 = sbr.rel (0) target = $region25
    $region24: #{_forward2d_jit.1} parent=1 // pred_region
      %82 = vsyncadd [#allocation4], 0
      %s84 = sshll.u32 [#allocation7], 4
      %s85 = int_to_ptr.vmem [resolvable:$true] %s84
      %s86 = sshll.u32 %s3, 4
      %s87 = int_to_ptr.hbm [resolvable:$true] %s86
      %89 = dma.vmem_to_hbm [thread:$0]  %s85, 128, %s87, [#allocation4]
    $region25: #{_forward2d_jit.1} parent=1 // pred_fallthru
      _
    // Predicated region
    $region26: #{_forward2d_jit.1} parent=1 // pred_check
      _
    $region27: #{_forward2d_jit.1} parent=1 // pred_check_branch
      %91 = sbr.rel (0) target = $region29
    $region28: #{_forward2d_jit.1} parent=1 // pred_region
      %93 = dma.done [#allocation4], 128
    $region29: #{_forward2d_jit.1} parent=1 // pred_fallthru
      _
    %94 = vsyncpa [#allocation3], 1
    %95 = vsyncpa [#allocation6], 1
    %96 = vsyncpa [#allocation4], 1

</llo_original>
